<compile_context>
chip_gen: v5e
topology: v5e:2x2
jax: 0.10.0
libtpu: 0.0.40
codegen_flags: <defaults>
</compile_context>

<pallas_src>
import functools
from typing import Any, List

import jax
import jax.numpy as jnp
from jax.experimental import pallas as pl
from jax.experimental.pallas import tpu as pltpu


def _embed_kernel(idx_ref, tab_ref, out_ref, *, n_feats, emb_size, offsets):
    """Embed one batch chunk for all features.

    idx_ref : VMEM [Bb, F] int32   clamped indices for this batch chunk
    tab_ref : VMEM [V_total, E]    concatenated tables (same block every grid
                                   step -> fetched once, stays resident)
    out_ref : VMEM [Bb, F*E]       lane-dense output slab
    """
    bb = idx_ref.shape[0]
    v_total = tab_ref.shape[0]

    idx = idx_ref[...]                                   # [Bb, F] int32
    tab = tab_ref[...]                                   # [V_total, E]
    # Lane iota over the (concatenated) vocab axis, reused for every feature.
    vocab_iota = jax.lax.broadcasted_iota(jnp.int32, (bb, v_total), 1)

    for f in range(n_feats):                             # F is small and static
        rows = idx[:, f:f + 1] + offsets[f]              # [Bb, 1] rows into tab
        onehot = (vocab_iota == rows).astype(tab.dtype)  # [Bb, V_total]
        # One-hot row selection on the MXU. HIGHEST precision keeps the f32
        # table values exact (one-hot * value reconstructs the value, f32 acc).
        emb = jnp.dot(
            onehot,
            tab,
            preferred_element_type=jnp.float32,
            precision=jax.lax.Precision.HIGHEST,
        )                                                # [Bb, E]
        out_ref[:, f * emb_size:(f + 1) * emb_size] = emb.astype(out_ref.dtype)


def _round_up(x: int, m: int) -> int:
    return ((x + m - 1) // m) * m


def categorical_embed_pallas(
    idx_bf: jax.Array,
    tables_cat: jax.Array,
    vocab_sizes: List[int],
    *,
    block_b: int = 128,
) -> jax.Array:
    """idx_bf: [B, F] int indices; tables_cat: [V_total, E] concatenated tables.

    Returns [B, 1, F * E] (PyTorch CategoricalEmbedder output convention).
    """
    B, F = idx_bf.shape
    V_total, E = tables_cat.shape
    assert len(vocab_sizes) == F
    assert sum(vocab_sizes) == V_total

    # Static per-feature row offsets into the concatenated table.
    offsets = [0]
    for v in vocab_sizes[:-1]:
        offsets.append(offsets[-1] + v)
    offsets = tuple(offsets)

    # Clamp indices to each feature's vocab (torch would raise on OOB).
    vmax = jnp.asarray(vocab_sizes, dtype=jnp.int32)
    idx = jnp.clip(idx_bf.astype(jnp.int32), 0, vmax[None, :] - 1)

    # Batch chunking: lane-dense (Bb, F*E) output slabs; batch axis is the
    # "parallel" grid axis (even 2-TC split on v7x).
    Bb = min(block_b, _round_up(B, 8))
    B_pad = _round_up(B, Bb)
    if B_pad != B:
        idx = jnp.pad(idx, ((0, B_pad - B), (0, 0)))

    # VMEM budget: resident table + double-buffered idx/out blocks. Keep under
    # a conservative 24 MiB so the v7x 32 MiB scoped default is never exceeded.
    itemsize = tables_cat.dtype.itemsize
    tab_bytes = V_total * E * itemsize
    out_blk_bytes = Bb * F * E * itemsize
    idx_blk_bytes = Bb * 128 * 4  # lane-padded int32 block
    vmem_needed = 2 * (tab_bytes + out_blk_bytes + idx_blk_bytes)
    if vmem_needed > 24 * 1024 * 1024:
        # TODO(synk): huge-vocab fallback (per-row HBM DMA gather) not implemented.
        raise NotImplementedError(
            "concatenated embedding table too large for the VMEM-resident fast path"
        )

    kernel = functools.partial(
        _embed_kernel, n_feats=F, emb_size=E, offsets=offsets
    )

    cost = pl.CostEstimate(
        flops=2 * B_pad * V_total * E * F,
        transcendentals=0,
        bytes_accessed=tab_bytes + B_pad * F * 4 + B_pad * F * E * itemsize,
    )

    out = pl.pallas_call(
        kernel,
        out_shape=jax.ShapeDtypeStruct((B_pad, F * E), tables_cat.dtype),
        grid_spec=pltpu.PrefetchScalarGridSpec(
            num_scalar_prefetch=0,
            grid=(B_pad // Bb,),
            in_specs=[
                pl.BlockSpec((Bb, F), lambda i: (i, 0)),          # indices chunk
                pl.BlockSpec((V_total, E), lambda i: (0, 0)),     # resident table
            ],
            out_specs=pl.BlockSpec((Bb, F * E), lambda i: (i, 0)),
        ),
        compiler_params=pltpu.CompilerParams(
            dimension_semantics=("parallel",),
        ),
        cost_estimate=cost,
    )(idx, tables_cat)

    # [B, F*E] is already the concat layout; add the singleton middle dim.
    return out[:B, None, :]


class CategoricalEmbedderPallas:
    """JAX/Pallas port of CategoricalEmbedder (max_norm=None path)."""

    def __init__(self, cat_feats: List[Any], embedding_size: int = 128, seed: int = 0):
        self.cat_feats = cat_feats
        self.embedding_size = embedding_size
        self.output_length = len(cat_feats) * embedding_size

        self.conversions = []
        self.vocab_sizes = []
        for cf in cat_feats:
            if isinstance(cf, int):
                self.conversions.append(None)
                self.vocab_sizes.append(cf)
            else:  # list/tuple of category values -> index mapping
                self.conversions.append({str(k): i for i, k in enumerate(cf)})
                self.vocab_sizes.append(len(cf))

        key = jax.random.PRNGKey(seed)
        tabs = []
        for i, v in enumerate(self.vocab_sizes):
            k = jax.random.fold_in(key, i)
            # torch.nn.Embedding default init: N(0, 1)
            tabs.append(jax.random.normal(k, (v, embedding_size), dtype=jnp.float32))
        # Unpadded concat along the vocab axis.
        self.tables_cat = jnp.concatenate(tabs, axis=0)  # [sum(v), E]

    def convert_indices(self, X: List[List[Any]]) -> jax.Array:
        """List-of-lists path of the original forward (Python glue)."""
        rows = []
        for row in X:
            rows.append(
                [
                    conv[str(x)] if conv is not None else int(x)
                    for x, conv in zip(row, self.conversions)
                ]
            )
        return jnp.asarray(rows, dtype=jnp.int32)

    def __call__(self, X) -> jax.Array:
        if isinstance(X, (list, tuple)):
            X = self.convert_indices(X)
        X = jnp.asarray(X)
        if X.ndim == 1:
            X = X[:, None]
        elif X.ndim != 2:
            raise ValueError(f"X must have 1 or 2 dims, got {X.ndim}")
        return categorical_embed_pallas(
            X.astype(jnp.int32), self.tables_cat, self.vocab_sizes
        )


if __name__ == "__main__":
    # Small deterministic example: batch=2, 3 categorical features, E=128.
    cat_feats = [6, 10, ["a", "b", "c", "d"]]
    embedding_size = 128
    batch = 2

    embedder = CategoricalEmbedderPallas(cat_feats, embedding_size, seed=0)

    key = jax.random.PRNGKey(0)
    cols = []
    for i, v in enumerate(embedder.vocab_sizes):
        k = jax.random.fold_in(key, 100 + i)
        cols.append(jax.random.randint(k, (batch,), 0, v, dtype=jnp.int32))
    X = jnp.stack(cols, axis=1)  # [B, F] int32 indices

    out = jax.block_until_ready(embedder(X))

    # Reference (plain JAX) check of the gather + concat semantics.
    offs = [0]
    for v in embedder.vocab_sizes[:-1]:
        offs.append(offs[-1] + v)
    ref_parts = []
    for f, v in enumerate(embedder.vocab_sizes):
        table_f = embedder.tables_cat[offs[f]: offs[f] + v]
        ref_parts.append(jnp.take(table_f, X[:, f], axis=0))
    ref = jnp.concatenate(ref_parts, axis=1)[:, None, :]

    assert out.shape == (batch, 1, len(cat_feats) * embedding_size), out.shape
    assert jnp.allclose(out, ref, atol=1e-5, rtol=1e-5), "Pallas output mismatch vs reference"
    print("KERNEL_OK")
</pallas_src>

<mosaic_0001>
module attributes {stable_mosaic.version = 11 : i64} {
  func.func @_embed_kernel(%arg0: i32, %arg1: memref<8x3xi32, #tpu.memory_space<vmem>>, %arg2: memref<20x128xf32, #tpu.memory_space<vmem>>, %arg3: memref<8x384xf32, #tpu.memory_space<vmem>>) attributes {dimension_semantics = [#tpu.dimension_semantics<parallel>], iteration_bounds = array<i64: 1>, scalar_prefetch = 0 : i64, scratch_operands = 0 : i64, tpu.core_type = #tpu.core_type<tc>, window_params = [{transform_indices = @transform_0, window_bounds = array<i64: 8, 3>}, {pipeline_mode = #tpu.pipeline_mode<synchronous>, transform_indices = @transform_1, window_bounds = array<i64: 20, 128>}, {transform_indices = @transform_2, window_bounds = array<i64: 8, 384>}]} {
    %c0 = arith.constant 0 : index
    %c0_0 = arith.constant 0 : index
    %0 = vector.load %arg1[%c0, %c0_0] : memref<8x3xi32, #tpu.memory_space<vmem>>, vector<8x3xi32>
    %c0_1 = arith.constant 0 : index
    %c0_2 = arith.constant 0 : index
    %1 = vector.load %arg2[%c0_1, %c0_2] : memref<20x128xf32, #tpu.memory_space<vmem>>, vector<20x128xf32>
    %2 = tpu.iota {dimensions = array<i32: 1>} : vector<8x20xi32>
    %3 = vector.extract_strided_slice %0 {offsets = [0, 0], sizes = [8, 1], strides = [1, 1]} : vector<8x3xi32> to vector<8x1xi32>
    %c0_i32 = arith.constant 0 : i32
    %4 = vector.broadcast %c0_i32 : i32 to vector<8x1xi32>
    %5 = arith.addi %3, %4 : vector<8x1xi32>
    %6 = vector.broadcast %5 : vector<8x1xi32> to vector<8x20xi32>
    %7 = arith.cmpi eq, %2, %6 : vector<8x20xi32>
    %8 = arith.extui %7 : vector<8x20xi1> to vector<8x20xi32>
    %9 = arith.sitofp %8 : vector<8x20xi32> to vector<8x20xf32>
    %cst = arith.constant dense<0.000000e+00> : vector<8x128xf32>
    %10 = tpu.matmul %9, %1, %cst {dimension_numbers = #tpu.dot_dimension_numbers<[1], [0], [0], [1], [0, 0, 1, 1], [], []>, precision = #tpu.contract_precision<fp32>} : vector<8x20xf32>, vector<20x128xf32>, vector<8x128xf32> -> vector<8x128xf32>
    %c0_3 = arith.constant 0 : index
    %c0_4 = arith.constant 0 : index
    %11 = vector.load %arg3[%c0_3, %c0_4] : memref<8x384xf32, #tpu.memory_space<vmem>>, vector<8x128xf32>
    tpu.vector_store %arg3[%c0_3, %c0_4], %10 {strides = array<i32>} : memref<8x384xf32, #tpu.memory_space<vmem>>, vector<8x128xf32>,
    %12 = vector.extract_strided_slice %0 {offsets = [0, 1], sizes = [8, 1], strides = [1, 1]} : vector<8x3xi32> to vector<8x1xi32>
    %c6_i32 = arith.constant 6 : i32
    %13 = vector.broadcast %c6_i32 : i32 to vector<8x1xi32>
    %14 = arith.addi %12, %13 : vector<8x1xi32>
    %15 = vector.broadcast %14 : vector<8x1xi32> to vector<8x20xi32>
    %16 = arith.cmpi eq, %2, %15 : vector<8x20xi32>
    %17 = arith.extui %16 : vector<8x20xi1> to vector<8x20xi32>
    %18 = arith.sitofp %17 : vector<8x20xi32> to vector<8x20xf32>
    %cst_5 = arith.constant dense<0.000000e+00> : vector<8x128xf32>
    %19 = tpu.matmul %18, %1, %cst_5 {dimension_numbers = #tpu.dot_dimension_numbers<[1], [0], [0], [1], [0, 0, 1, 1], [], []>, precision = #tpu.contract_precision<fp32>} : vector<8x20xf32>, vector<20x128xf32>, vector<8x128xf32> -> vector<8x128xf32>
    %c0_6 = arith.constant 0 : index
    %c128 = arith.constant 128 : index
    %20 = vector.load %arg3[%c0_6, %c128] : memref<8x384xf32, #tpu.memory_space<vmem>>, vector<8x128xf32>
    tpu.vector_store %arg3[%c0_6, %c128], %19 {strides = array<i32>} : memref<8x384xf32, #tpu.memory_space<vmem>>, vector<8x128xf32>,
    %21 = vector.extract_strided_slice %0 {offsets = [0, 2], sizes = [8, 1], strides = [1, 1]} : vector<8x3xi32> to vector<8x1xi32>
    %c16_i32 = arith.constant 16 : i32
    %22 = vector.broadcast %c16_i32 : i32 to vector<8x1xi32>
    %23 = arith.addi %21, %22 : vector<8x1xi32>
    %24 = vector.broadcast %23 : vector<8x1xi32> to vector<8x20xi32>
    %25 = arith.cmpi eq, %2, %24 : vector<8x20xi32>
    %26 = arith.extui %25 : vector<8x20xi1> to vector<8x20xi32>
    %27 = arith.sitofp %26 : vector<8x20xi32> to vector<8x20xf32>
    %cst_7 = arith.constant dense<0.000000e+00> : vector<8x128xf32>
    %28 = tpu.matmul %27, %1, %cst_7 {dimension_numbers = #tpu.dot_dimension_numbers<[1], [0], [0], [1], [0, 0, 1, 1], [], []>, precision = #tpu.contract_precision<fp32>} : vector<8x20xf32>, vector<20x128xf32>, vector<8x128xf32> -> vector<8x128xf32>
    %c0_8 = arith.constant 0 : index
    %c256 = arith.constant 256 : index
    %29 = vector.load %arg3[%c0_8, %c256] : memref<8x384xf32, #tpu.memory_space<vmem>>, vector<8x128xf32>
    tpu.vector_store %arg3[%c0_8, %c256], %28 {strides = array<i32>} : memref<8x384xf32, #tpu.memory_space<vmem>>, vector<8x128xf32>,
    return
  }
  func.func @transform_0(%arg0: i32) -> (i32, i32) {
    %c0_i32 = arith.constant 0 : i32
    %c0_i32_0 = arith.constant 0 : i32
    return %arg0, %c0_i32 : i32, i32
  }
  func.func @transform_1(%arg0: i32) -> (i32, i32) {
    %c0_i32 = arith.constant 0 : i32
    %c0_i32_0 = arith.constant 0 : i32
    %c0_i32_1 = arith.constant 0 : i32
    return %c0_i32, %c0_i32_0 : i32, i32
  }
  func.func @transform_2(%arg0: i32) -> (i32, i32) {
    %c0_i32 = arith.constant 0 : i32
    %c0_i32_0 = arith.constant 0 : i32
    return %arg0, %c0_i32 : i32, i32
  }
}

</mosaic_0001>

<llo_original>
// kernel: tpu_custom_call.1
$region0: #{tpu_custom_call.1}
  #allocation0 [shape = 'u32[]', space=smem, size = 0x4, offset = 0x4, fixed_abs, tag = 'smem constant byte address 0x4 - core index']
  #allocation1 [shape = 'u32[72,128]{1,0:T(1,128)}', space=vmem, size = 0x9000, scoped, tag = 'internal scratch']
  %s0 = inlined_call_operand.vmem [shape: s32[8,3], index: 0, kind: input, shape index: {}]
  %s1 = inlined_call_operand.hbm [shape: f32[20,128], index: 1, kind: input, shape index: {}]
  %s2 = inlined_call_operand.hbm [shape: f32[8,384], index: 2, kind: output, shape index: {}]
  %s3 = sld [smem:[#allocation0]]
  $region22: #{tpu_custom_call.1} parent=0
    _
  %s5 = ssub.s32 1, %s3
  %s6 = scalar_select 0, %s5, %s3
  $region1: #{tpu_custom_call.1} parent=0
    #allocation2 [shape = 'u8[12288]{0}', space=vmem, size = 0x3000, scoped, tag = 'input window, operand 1, single buffered']
    #allocation3 [shape = 's32[1]{0}', space=sflag, size = 0x4, scoped, tag = 'scoped memory for tpu_custom_call.1']
    #allocation4 [shape = 's32[1]{0}', space=sflag, size = 0x4, scoped, tag = 'scoped memory for tpu_custom_call.1']
    #allocation5 [shape = 'u8[12288]{0}', space=vmem, size = 0x3000, scoped, tag = 'output window, operand 0, single buffered']
    %7 = vsyncpa [#allocation3], 0
    %8 = vsyncpa [#allocation4], 0
    // Predicated region
    $region2: #{tpu_custom_call.1} parent=1 // pred_check
      _
    $region3: #{tpu_custom_call.1} parent=1 // pred_check_branch
      %10 = sbr.rel (0) target = $region5
    $region4: #{tpu_custom_call.1} parent=1 // pred_region
      _
    $region5: #{tpu_custom_call.1} parent=1 // pred_fallthru
      _
    // Predicated region
    $region6: #{tpu_custom_call.1} parent=1 // pred_check
      _
    $region7: #{tpu_custom_call.1} parent=1 // pred_check_branch
      %12 = sbr.rel (0) target = $region9
    $region8: #{tpu_custom_call.1} parent=1 // pred_region
      %14 = vsyncadd [#allocation3], 0
      %s15 = sshll.u32 %s1, 4
      %s16 = int_to_ptr.hbm [resolvable:$true] %s15
      %s17 = sshll.u32 [#allocation2], 4
      %s18 = int_to_ptr.vmem [resolvable:$true] %s17
      %23 = dma.hbm_to_vmem [thread:$0]  %s16, 384, %s18, [#allocation3], 128, 128, 8
    $region9: #{tpu_custom_call.1} parent=1 // pred_fallthru
      _
    // Predicated region
    $region10: #{tpu_custom_call.1} parent=1 // pred_check
      _
    $region11: #{tpu_custom_call.1} parent=1 // pred_check_branch
      %25 = sbr.rel (0) target = $region13
    $region12: #{tpu_custom_call.1} parent=1 // pred_region
      %27 = dma.done [#allocation3], 384
    $region13: #{tpu_custom_call.1} parent=1 // pred_fallthru
      _
    %v28 = vld [vmem:[%s0] sm:$0xff]
    %v29 = vld [vmem:[#allocation2] sm:$0xff]
    %v30 = vld [vmem:[#allocation2 + $0x8] sm:$0xff]
    %v31 = vld [vmem:[#allocation2 + $0x10] sm:$0xf]
    %v32 = vlaneseq
    %v33 = vand.u32 %v32, 127
    %34 = vset.pattern.permute.xlu0 0
    %35 = vperm.xlu0 %34, %v28
    %v36 = vpop.permute.xlu0 %35
    %vm37 = vcmp.eq.s32.totalorder %v33, %v36
    %v38 = vsel %vm37, 1, 0
    %v39 = vcvt.s32.f32 %v38
    %vm40 = vcmask 162816
    %v42 = vsel %vm40, %v39, 0
    %vm44 = vcmask 1043456
    %v46 = vsel %vm44, %v31, 0
    %48 = vmatpush.msra.mxu0 0.0
    %49 = vmatpush.msra.mxu0 0.0
    %50 = vmatpush.msra.mxu0 0.0
    %51 = vmatpush.msra.mxu0 0.0
    %52 = vmatpush.msra.mxu0 0.0
    %53 = vmatpush.msra.mxu0 0.0
    %54 = vmatpush.msra.mxu0 0.0
    %55 = vmatpush.msra.mxu0 0.0
    %56 = vmatpush.msra.mxu0 0.0
    %57 = vmatpush.msra.mxu0 0.0
    %58 = vmatpush.msra.mxu0 0.0
    %59 = vmatpush.msra.mxu0 0.0
    %60 = vmatpush.msra.mxu0 0.0
    %v61 = vand.u32 %v46, 4294901760
    %62 = vmatpush.msra.mxu0 %v61
    %v63 = vand.u32 %v30, 4294901760
    %64 = vmatpush.msra.mxu0 %v63
    %v65 = vand.u32 %v29, 4294901760
    %66 = vmatpush.msra.mxu0 %v65
    %v67 = vand.u32 %v42, 4294901760
    %v68 = vsub.f32 %v42, %v67
    %v69 = vand.u32 %v68, 4294901760
    %v70 = vsub.f32 %v68, %v69
    %v71 = vand.u32 %v70, 4294901760
    %72 = vmatmul.f32.gmra.mxu0 %v71
    %v73 = vpop.f32.mrf.mxu0
    %v74 = vadd.f32 0.0, %v73
    %75 = vdwg.mxu0
    %76 = vmatpush.msra.mxu0 0.0
    %77 = vmatpush.msra.mxu0 0.0
    %78 = vmatpush.msra.mxu0 0.0
    %79 = vmatpush.msra.mxu0 0.0
    %80 = vmatpush.msra.mxu0 0.0
    %81 = vmatpush.msra.mxu0 0.0
    %82 = vmatpush.msra.mxu0 0.0
    %83 = vmatpush.msra.mxu0 0.0
    %84 = vmatpush.msra.mxu0 0.0
    %85 = vmatpush.msra.mxu0 0.0
    %86 = vmatpush.msra.mxu0 0.0
    %87 = vmatpush.msra.mxu0 0.0
    %88 = vmatpush.msra.mxu0 0.0
    %v89 = vand.u32 %v46, 4294901760
    %v90 = vsub.f32 %v46, %v89
    %v91 = vand.u32 %v90, 4294901760
    %v92 = vsub.f32 %v90, %v91
    %v93 = vand.u32 %v92, 4294901760
    %94 = vmatpush.msra.mxu0 %v93
    %v95 = vand.u32 %v30, 4294901760
    %v96 = vsub.f32 %v30, %v95
    %v97 = vand.u32 %v96, 4294901760
    %v98 = vsub.f32 %v96, %v97
    %v99 = vand.u32 %v98, 4294901760
    %100 = vmatpush.msra.mxu0 %v99
    %v101 = vand.u32 %v29, 4294901760
    %v102 = vsub.f32 %v29, %v101
    %v103 = vand.u32 %v102, 4294901760
    %v104 = vsub.f32 %v102, %v103
    %v105 = vand.u32 %v104, 4294901760
    %106 = vmatpush.msra.mxu0 %v105
    %v107 = vand.u32 %v42, 4294901760
    %108 = vmatmul.f32.gmra.mxu0 %v107
    %v109 = vpop.f32.mrf.mxu0
    %v110 = vadd.f32 %v74, %v109
    %111 = vdwg.mxu0
    %112 = vmatpush.msra.mxu0 0.0
    %113 = vmatpush.msra.mxu0 0.0
    %114 = vmatpush.msra.mxu0 0.0
    %115 = vmatpush.msra.mxu0 0.0
    %116 = vmatpush.msra.mxu0 0.0
    %117 = vmatpush.msra.mxu0 0.0
    %118 = vmatpush.msra.mxu0 0.0
    %119 = vmatpush.msra.mxu0 0.0
    %120 = vmatpush.msra.mxu0 0.0
    %121 = vmatpush.msra.mxu0 0.0
    %122 = vmatpush.msra.mxu0 0.0
    %123 = vmatpush.msra.mxu0 0.0
    %124 = vmatpush.msra.mxu0 0.0
    %v125 = vand.u32 %v46, 4294901760
    %v126 = vsub.f32 %v46, %v125
    %127 = vmatpush.msra.mxu0 %v126
    %v128 = vand.u32 %v30, 4294901760
    %v129 = vsub.f32 %v30, %v128
    %130 = vmatpush.msra.mxu0 %v129
    %v131 = vand.u32 %v29, 4294901760
    %v132 = vsub.f32 %v29, %v131
    %133 = vmatpush.msra.mxu0 %v132
    %v134 = vand.u32 %v42, 4294901760
    %v135 = vsub.f32 %v42, %v134
    %136 = vmatmul.f32.gmra.mxu0 %v135
    %v137 = vpop.f32.mrf.mxu0
    %v138 = vadd.f32 %v110, %v137
    %139 = vdwg.mxu0
    %140 = vmatpush.msra.mxu0 0.0
    %141 = vmatpush.msra.mxu0 0.0
    %142 = vmatpush.msra.mxu0 0.0
    %143 = vmatpush.msra.mxu0 0.0
    %144 = vmatpush.msra.mxu0 0.0
    %145 = vmatpush.msra.mxu0 0.0
    %146 = vmatpush.msra.mxu0 0.0
    %147 = vmatpush.msra.mxu0 0.0
    %148 = vmatpush.msra.mxu0 0.0
    %149 = vmatpush.msra.mxu0 0.0
    %150 = vmatpush.msra.mxu0 0.0
    %151 = vmatpush.msra.mxu0 0.0
    %152 = vmatpush.msra.mxu0 0.0
    %v153 = vand.u32 %v46, 4294901760
    %154 = vmatpush.msra.mxu0 %v153
    %v155 = vand.u32 %v30, 4294901760
    %156 = vmatpush.msra.mxu0 %v155
    %v157 = vand.u32 %v29, 4294901760
    %158 = vmatpush.msra.mxu0 %v157
    %v159 = vand.u32 %v42, 4294901760
    %v160 = vsub.f32 %v42, %v159
    %v161 = vand.u32 %v160, 4294901760
    %162 = vmatmul.f32.gmra.mxu0 %v161
    %v163 = vpop.f32.mrf.mxu0
    %v164 = vadd.f32 %v138, %v163
    %165 = vdwg.mxu0
    %166 = vmatpush.msra.mxu0 0.0
    %167 = vmatpush.msra.mxu0 0.0
    %168 = vmatpush.msra.mxu0 0.0
    %169 = vmatpush.msra.mxu0 0.0
    %170 = vmatpush.msra.mxu0 0.0
    %171 = vmatpush.msra.mxu0 0.0
    %172 = vmatpush.msra.mxu0 0.0
    %173 = vmatpush.msra.mxu0 0.0
    %174 = vmatpush.msra.mxu0 0.0
    %175 = vmatpush.msra.mxu0 0.0
    %176 = vmatpush.msra.mxu0 0.0
    %177 = vmatpush.msra.mxu0 0.0
    %178 = vmatpush.msra.mxu0 0.0
    %v179 = vand.u32 %v46, 4294901760
    %v180 = vsub.f32 %v46, %v179
    %v181 = vand.u32 %v180, 4294901760
    %182 = vmatpush.msra.mxu0 %v181
    %v183 = vand.u32 %v30, 4294901760
    %v184 = vsub.f32 %v30, %v183
    %v185 = vand.u32 %v184, 4294901760
    %186 = vmatpush.msra.mxu0 %v185
    %v187 = vand.u32 %v29, 4294901760
    %v188 = vsub.f32 %v29, %v187
    %v189 = vand.u32 %v188, 4294901760
    %190 = vmatpush.msra.mxu0 %v189
    %v191 = vand.u32 %v42, 4294901760
    %192 = vmatmul.f32.gmra.mxu0 %v191
    %v193 = vpop.f32.mrf.mxu0
    %v194 = vadd.f32 %v164, %v193
    %195 = vdwg.mxu0
    %196 = vmatpush.msra.mxu0 0.0
    %197 = vmatpush.msra.mxu0 0.0
    %198 = vmatpush.msra.mxu0 0.0
    %199 = vmatpush.msra.mxu0 0.0
    %200 = vmatpush.msra.mxu0 0.0
    %201 = vmatpush.msra.mxu0 0.0
    %202 = vmatpush.msra.mxu0 0.0
    %203 = vmatpush.msra.mxu0 0.0
    %204 = vmatpush.msra.mxu0 0.0
    %205 = vmatpush.msra.mxu0 0.0
    %206 = vmatpush.msra.mxu0 0.0
    %207 = vmatpush.msra.mxu0 0.0
    %208 = vmatpush.msra.mxu0 0.0
    %v209 = vand.u32 %v46, 4294901760
    %210 = vmatpush.msra.mxu0 %v209
    %v211 = vand.u32 %v30, 4294901760
    %212 = vmatpush.msra.mxu0 %v211
    %v213 = vand.u32 %v29, 4294901760
    %214 = vmatpush.msra.mxu0 %v213
    %v215 = vand.u32 %v42, 4294901760
    %216 = vmatmul.f32.gmra.mxu0 %v215
    %v217 = vpop.f32.mrf.mxu0
    %v218 = vadd.f32 %v194, %v217
    %219 = vdwg.mxu0
    %220 = vst [vmem:[#allocation5] sm:$0xff] %v218
    %v221 = vadd.s32 %v28, 6
    %222 = vset.pattern.permute.xlu0 1
    %223 = vperm.xlu0 %222, %v221
    %v224 = vpop.permute.xlu0 %223
    %vm225 = vcmp.eq.s32.totalorder %v33, %v224
    %v226 = vsel %vm225, 1, 0
    %v227 = vcvt.s32.f32 %v226
    %v229 = vsel %vm40, %v227, 0
    %231 = vmatpush.msra.mxu0 0.0
    %232 = vmatpush.msra.mxu0 0.0
    %233 = vmatpush.msra.mxu0 0.0
    %234 = vmatpush.msra.mxu0 0.0
    %235 = vmatpush.msra.mxu0 0.0
    %236 = vmatpush.msra.mxu0 0.0
    %237 = vmatpush.msra.mxu0 0.0
    %238 = vmatpush.msra.mxu0 0.0
    %239 = vmatpush.msra.mxu0 0.0
    %240 = vmatpush.msra.mxu0 0.0
    %241 = vmatpush.msra.mxu0 0.0
    %242 = vmatpush.msra.mxu0 0.0
    %243 = vmatpush.msra.mxu0 0.0
    %v244 = vand.u32 %v46, 4294901760
    %245 = vmatpush.msra.mxu0 %v244
    %v246 = vand.u32 %v30, 4294901760
    %247 = vmatpush.msra.mxu0 %v246
    %v248 = vand.u32 %v29, 4294901760
    %249 = vmatpush.msra.mxu0 %v248
    %v250 = vand.u32 %v229, 4294901760
    %v251 = vsub.f32 %v229, %v250
    %v252 = vand.u32 %v251, 4294901760
    %v253 = vsub.f32 %v251, %v252
    %v254 = vand.u32 %v253, 4294901760
    %255 = vmatmul.f32.gmra.mxu0 %v254
    %v256 = vpop.f32.mrf.mxu0
    %v257 = vadd.f32 0.0, %v256
    %258 = vdwg.mxu0
    %259 = vmatpush.msra.mxu0 0.0
    %260 = vmatpush.msra.mxu0 0.0
    %261 = vmatpush.msra.mxu0 0.0
    %262 = vmatpush.msra.mxu0 0.0
    %263 = vmatpush.msra.mxu0 0.0
    %264 = vmatpush.msra.mxu0 0.0
    %265 = vmatpush.msra.mxu0 0.0
    %266 = vmatpush.msra.mxu0 0.0
    %267 = vmatpush.msra.mxu0 0.0
    %268 = vmatpush.msra.mxu0 0.0
    %269 = vmatpush.msra.mxu0 0.0
    %270 = vmatpush.msra.mxu0 0.0
    %271 = vmatpush.msra.mxu0 0.0
    %v272 = vand.u32 %v46, 4294901760
    %v273 = vsub.f32 %v46, %v272
    %v274 = vand.u32 %v273, 4294901760
    %v275 = vsub.f32 %v273, %v274
    %v276 = vand.u32 %v275, 4294901760
    %277 = vmatpush.msra.mxu0 %v276
    %v278 = vand.u32 %v30, 4294901760
    %v279 = vsub.f32 %v30, %v278
    %v280 = vand.u32 %v279, 4294901760
    %v281 = vsub.f32 %v279, %v280
    %v282 = vand.u32 %v281, 4294901760
    %283 = vmatpush.msra.mxu0 %v282
    %v284 = vand.u32 %v29, 4294901760
    %v285 = vsub.f32 %v29, %v284
    %v286 = vand.u32 %v285, 4294901760
    %v287 = vsub.f32 %v285, %v286
    %v288 = vand.u32 %v287, 4294901760
    %289 = vmatpush.msra.mxu0 %v288
    %v290 = vand.u32 %v229, 4294901760
    %291 = vmatmul.f32.gmra.mxu0 %v290
    %v292 = vpop.f32.mrf.mxu0
    %v293 = vadd.f32 %v257, %v292
    %294 = vdwg.mxu0
    %295 = vmatpush.msra.mxu0 0.0
    %296 = vmatpush.msra.mxu0 0.0
    %297 = vmatpush.msra.mxu0 0.0
    %298 = vmatpush.msra.mxu0 0.0
    %299 = vmatpush.msra.mxu0 0.0
    %300 = vmatpush.msra.mxu0 0.0
    %301 = vmatpush.msra.mxu0 0.0
    %302 = vmatpush.msra.mxu0 0.0
    %303 = vmatpush.msra.mxu0 0.0
    %304 = vmatpush.msra.mxu0 0.0
    %305 = vmatpush.msra.mxu0 0.0
    %306 = vmatpush.msra.mxu0 0.0
    %307 = vmatpush.msra.mxu0 0.0
    %v308 = vand.u32 %v46, 4294901760
    %v309 = vsub.f32 %v46, %v308
    %310 = vmatpush.msra.mxu0 %v309
    %v311 = vand.u32 %v30, 4294901760
    %v312 = vsub.f32 %v30, %v311
    %313 = vmatpush.msra.mxu0 %v312
    %v314 = vand.u32 %v29, 4294901760
    %v315 = vsub.f32 %v29, %v314
    %316 = vmatpush.msra.mxu0 %v315
    %v317 = vand.u32 %v229, 4294901760
    %v318 = vsub.f32 %v229, %v317
    %319 = vmatmul.f32.gmra.mxu0 %v318
    %v320 = vpop.f32.mrf.mxu0
    %v321 = vadd.f32 %v293, %v320
    %322 = vdwg.mxu0
    %323 = vmatpush.msra.mxu0 0.0
    %324 = vmatpush.msra.mxu0 0.0
    %325 = vmatpush.msra.mxu0 0.0
    %326 = vmatpush.msra.mxu0 0.0
    %327 = vmatpush.msra.mxu0 0.0
    %328 = vmatpush.msra.mxu0 0.0
    %329 = vmatpush.msra.mxu0 0.0
    %330 = vmatpush.msra.mxu0 0.0
    %331 = vmatpush.msra.mxu0 0.0
    %332 = vmatpush.msra.mxu0 0.0
    %333 = vmatpush.msra.mxu0 0.0
    %334 = vmatpush.msra.mxu0 0.0
    %335 = vmatpush.msra.mxu0 0.0
    %v336 = vand.u32 %v46, 4294901760
    %337 = vmatpush.msra.mxu0 %v336
    %v338 = vand.u32 %v30, 4294901760
    %339 = vmatpush.msra.mxu0 %v338
    %v340 = vand.u32 %v29, 4294901760
    %341 = vmatpush.msra.mxu0 %v340
    %v342 = vand.u32 %v229, 4294901760
    %v343 = vsub.f32 %v229, %v342
    %v344 = vand.u32 %v343, 4294901760
    %345 = vmatmul.f32.gmra.mxu0 %v344
    %v346 = vpop.f32.mrf.mxu0
    %v347 = vadd.f32 %v321, %v346
    %348 = vdwg.mxu0
    %349 = vmatpush.msra.mxu0 0.0
    %350 = vmatpush.msra.mxu0 0.0
    %351 = vmatpush.msra.mxu0 0.0
    %352 = vmatpush.msra.mxu0 0.0
    %353 = vmatpush.msra.mxu0 0.0
    %354 = vmatpush.msra.mxu0 0.0
    %355 = vmatpush.msra.mxu0 0.0
    %356 = vmatpush.msra.mxu0 0.0
    %357 = vmatpush.msra.mxu0 0.0
    %358 = vmatpush.msra.mxu0 0.0
    %359 = vmatpush.msra.mxu0 0.0
    %360 = vmatpush.msra.mxu0 0.0
    %361 = vmatpush.msra.mxu0 0.0
    %v362 = vand.u32 %v46, 4294901760
    %v363 = vsub.f32 %v46, %v362
    %v364 = vand.u32 %v363, 4294901760
    %365 = vmatpush.msra.mxu0 %v364
    %v366 = vand.u32 %v30, 4294901760
    %v367 = vsub.f32 %v30, %v366
    %v368 = vand.u32 %v367, 4294901760
    %369 = vmatpush.msra.mxu0 %v368
    %v370 = vand.u32 %v29, 4294901760
    %v371 = vsub.f32 %v29, %v370
    %v372 = vand.u32 %v371, 4294901760
    %373 = vmatpush.msra.mxu0 %v372
    %v374 = vand.u32 %v229, 4294901760
    %375 = vmatmul.f32.gmra.mxu0 %v374
    %v376 = vpop.f32.mrf.mxu0
    %v377 = vadd.f32 %v347, %v376
    %378 = vdwg.mxu0
    %379 = vmatpush.msra.mxu0 0.0
    %380 = vmatpush.msra.mxu0 0.0
    %381 = vmatpush.msra.mxu0 0.0
    %382 = vmatpush.msra.mxu0 0.0
    %383 = vmatpush.msra.mxu0 0.0
    %384 = vmatpush.msra.mxu0 0.0
    %385 = vmatpush.msra.mxu0 0.0
    %386 = vmatpush.msra.mxu0 0.0
    %387 = vmatpush.msra.mxu0 0.0
    %388 = vmatpush.msra.mxu0 0.0
    %389 = vmatpush.msra.mxu0 0.0
    %390 = vmatpush.msra.mxu0 0.0
    %391 = vmatpush.msra.mxu0 0.0
    %v392 = vand.u32 %v46, 4294901760
    %393 = vmatpush.msra.mxu0 %v392
    %v394 = vand.u32 %v30, 4294901760
    %395 = vmatpush.msra.mxu0 %v394
    %v396 = vand.u32 %v29, 4294901760
    %397 = vmatpush.msra.mxu0 %v396
    %v398 = vand.u32 %v229, 4294901760
    %399 = vmatmul.f32.gmra.mxu0 %v398
    %v400 = vpop.f32.mrf.mxu0
    %v401 = vadd.f32 %v377, %v400
    %402 = vdwg.mxu0
    %403 = vst [vmem:[#allocation5 + $0x8] sm:$0xff] %v401
    %v404 = vadd.s32 %v28, 16
    %405 = vset.pattern.permute.xlu0 2
    %406 = vperm.xlu0 %405, %v404
    %v407 = vpop.permute.xlu0 %406
    %vm408 = vcmp.eq.s32.totalorder %v33, %v407
    %v409 = vsel %vm408, 1, 0
    %v410 = vcvt.s32.f32 %v409
    %v412 = vsel %vm40, %v410, 0
    %414 = vmatpush.msra.mxu0 0.0
    %415 = vmatpush.msra.mxu0 0.0
    %416 = vmatpush.msra.mxu0 0.0
    %417 = vmatpush.msra.mxu0 0.0
    %418 = vmatpush.msra.mxu0 0.0
    %419 = vmatpush.msra.mxu0 0.0
    %420 = vmatpush.msra.mxu0 0.0
    %421 = vmatpush.msra.mxu0 0.0
    %422 = vmatpush.msra.mxu0 0.0
    %423 = vmatpush.msra.mxu0 0.0
    %424 = vmatpush.msra.mxu0 0.0
    %425 = vmatpush.msra.mxu0 0.0
    %426 = vmatpush.msra.mxu0 0.0
    %v427 = vand.u32 %v46, 4294901760
    %428 = vmatpush.msra.mxu0 %v427
    %v429 = vand.u32 %v30, 4294901760
    %430 = vmatpush.msra.mxu0 %v429
    %v431 = vand.u32 %v29, 4294901760
    %432 = vmatpush.msra.mxu0 %v431
    %v433 = vand.u32 %v412, 4294901760
    %v434 = vsub.f32 %v412, %v433
    %v435 = vand.u32 %v434, 4294901760
    %v436 = vsub.f32 %v434, %v435
    %v437 = vand.u32 %v436, 4294901760
    %438 = vmatmul.f32.gmra.mxu0 %v437
    %v439 = vpop.f32.mrf.mxu0
    %v440 = vadd.f32 0.0, %v439
    %441 = vdwg.mxu0
    %442 = vmatpush.msra.mxu0 0.0
    %443 = vmatpush.msra.mxu0 0.0
    %444 = vmatpush.msra.mxu0 0.0
    %445 = vmatpush.msra.mxu0 0.0
    %446 = vmatpush.msra.mxu0 0.0
    %447 = vmatpush.msra.mxu0 0.0
    %448 = vmatpush.msra.mxu0 0.0
    %449 = vmatpush.msra.mxu0 0.0
    %450 = vmatpush.msra.mxu0 0.0
    %451 = vmatpush.msra.mxu0 0.0
    %452 = vmatpush.msra.mxu0 0.0
    %453 = vmatpush.msra.mxu0 0.0
    %454 = vmatpush.msra.mxu0 0.0
    %v455 = vand.u32 %v46, 4294901760
    %v456 = vsub.f32 %v46, %v455
    %v457 = vand.u32 %v456, 4294901760
    %v458 = vsub.f32 %v456, %v457
    %v459 = vand.u32 %v458, 4294901760
    %460 = vmatpush.msra.mxu0 %v459
    %v461 = vand.u32 %v30, 4294901760
    %v462 = vsub.f32 %v30, %v461
    %v463 = vand.u32 %v462, 4294901760
    %v464 = vsub.f32 %v462, %v463
    %v465 = vand.u32 %v464, 4294901760
    %466 = vmatpush.msra.mxu0 %v465
    %v467 = vand.u32 %v29, 4294901760
    %v468 = vsub.f32 %v29, %v467
    %v469 = vand.u32 %v468, 4294901760
    %v470 = vsub.f32 %v468, %v469
    %v471 = vand.u32 %v470, 4294901760
    %472 = vmatpush.msra.mxu0 %v471
    %v473 = vand.u32 %v412, 4294901760
    %474 = vmatmul.f32.gmra.mxu0 %v473
    %v475 = vpop.f32.mrf.mxu0
    %v476 = vadd.f32 %v440, %v475
    %477 = vdwg.mxu0
    %478 = vmatpush.msra.mxu0 0.0
    %479 = vmatpush.msra.mxu0 0.0
    %480 = vmatpush.msra.mxu0 0.0
    %481 = vmatpush.msra.mxu0 0.0
    %482 = vmatpush.msra.mxu0 0.0
    %483 = vmatpush.msra.mxu0 0.0
    %484 = vmatpush.msra.mxu0 0.0
    %485 = vmatpush.msra.mxu0 0.0
    %486 = vmatpush.msra.mxu0 0.0
    %487 = vmatpush.msra.mxu0 0.0
    %488 = vmatpush.msra.mxu0 0.0
    %489 = vmatpush.msra.mxu0 0.0
    %490 = vmatpush.msra.mxu0 0.0
    %v491 = vand.u32 %v46, 4294901760
    %v492 = vsub.f32 %v46, %v491
    %493 = vmatpush.msra.mxu0 %v492
    %v494 = vand.u32 %v30, 4294901760
    %v495 = vsub.f32 %v30, %v494
    %496 = vmatpush.msra.mxu0 %v495
    %v497 = vand.u32 %v29, 4294901760
    %v498 = vsub.f32 %v29, %v497
    %499 = vmatpush.msra.mxu0 %v498
    %v500 = vand.u32 %v412, 4294901760
    %v501 = vsub.f32 %v412, %v500
    %502 = vmatmul.f32.gmra.mxu0 %v501
    %v503 = vpop.f32.mrf.mxu0
    %v504 = vadd.f32 %v476, %v503
    %505 = vdwg.mxu0
    %506 = vmatpush.msra.mxu0 0.0
    %507 = vmatpush.msra.mxu0 0.0
    %508 = vmatpush.msra.mxu0 0.0
    %509 = vmatpush.msra.mxu0 0.0
    %510 = vmatpush.msra.mxu0 0.0
    %511 = vmatpush.msra.mxu0 0.0
    %512 = vmatpush.msra.mxu0 0.0
    %513 = vmatpush.msra.mxu0 0.0
    %514 = vmatpush.msra.mxu0 0.0
    %515 = vmatpush.msra.mxu0 0.0
    %516 = vmatpush.msra.mxu0 0.0
    %517 = vmatpush.msra.mxu0 0.0
    %518 = vmatpush.msra.mxu0 0.0
    %v519 = vand.u32 %v46, 4294901760
    %520 = vmatpush.msra.mxu0 %v519
    %v521 = vand.u32 %v30, 4294901760
    %522 = vmatpush.msra.mxu0 %v521
    %v523 = vand.u32 %v29, 4294901760
    %524 = vmatpush.msra.mxu0 %v523
    %v525 = vand.u32 %v412, 4294901760
    %v526 = vsub.f32 %v412, %v525
    %v527 = vand.u32 %v526, 4294901760
    %528 = vmatmul.f32.gmra.mxu0 %v527
    %v529 = vpop.f32.mrf.mxu0
    %v530 = vadd.f32 %v504, %v529
    %531 = vdwg.mxu0
    %532 = vmatpush.msra.mxu0 0.0
    %533 = vmatpush.msra.mxu0 0.0
    %534 = vmatpush.msra.mxu0 0.0
    %535 = vmatpush.msra.mxu0 0.0
    %536 = vmatpush.msra.mxu0 0.0
    %537 = vmatpush.msra.mxu0 0.0
    %538 = vmatpush.msra.mxu0 0.0
    %539 = vmatpush.msra.mxu0 0.0
    %540 = vmatpush.msra.mxu0 0.0
    %541 = vmatpush.msra.mxu0 0.0
    %542 = vmatpush.msra.mxu0 0.0
    %543 = vmatpush.msra.mxu0 0.0
    %544 = vmatpush.msra.mxu0 0.0
    %v545 = vand.u32 %v46, 4294901760
    %v546 = vsub.f32 %v46, %v545
    %v547 = vand.u32 %v546, 4294901760
    %548 = vmatpush.msra.mxu0 %v547
    %v549 = vand.u32 %v30, 4294901760
    %v550 = vsub.f32 %v30, %v549
    %v551 = vand.u32 %v550, 4294901760
    %552 = vmatpush.msra.mxu0 %v551
    %v553 = vand.u32 %v29, 4294901760
    %v554 = vsub.f32 %v29, %v553
    %v555 = vand.u32 %v554, 4294901760
    %556 = vmatpush.msra.mxu0 %v555
    %v557 = vand.u32 %v412, 4294901760
    %558 = vmatmul.f32.gmra.mxu0 %v557
    %v559 = vpop.f32.mrf.mxu0
    %v560 = vadd.f32 %v530, %v559
    %561 = vdwg.mxu0
    %562 = vmatpush.msra.mxu0 0.0
    %563 = vmatpush.msra.mxu0 0.0
    %564 = vmatpush.msra.mxu0 0.0
    %565 = vmatpush.msra.mxu0 0.0
    %566 = vmatpush.msra.mxu0 0.0
    %567 = vmatpush.msra.mxu0 0.0
    %568 = vmatpush.msra.mxu0 0.0
    %569 = vmatpush.msra.mxu0 0.0
    %570 = vmatpush.msra.mxu0 0.0
    %571 = vmatpush.msra.mxu0 0.0
    %572 = vmatpush.msra.mxu0 0.0
    %573 = vmatpush.msra.mxu0 0.0
    %574 = vmatpush.msra.mxu0 0.0
    %v575 = vand.u32 %v46, 4294901760
    %576 = vmatpush.msra.mxu0 %v575
    %v577 = vand.u32 %v30, 4294901760
    %578 = vmatpush.msra.mxu0 %v577
    %v579 = vand.u32 %v29, 4294901760
    %580 = vmatpush.msra.mxu0 %v579
    %v581 = vand.u32 %v412, 4294901760
    %582 = vmatmul.f32.gmra.mxu0 %v581
    %v583 = vpop.f32.mrf.mxu0
    %v584 = vadd.f32 %v560, %v583
    %585 = vdwg.mxu0
    %586 = vst [vmem:[#allocation5 + $0x10] sm:$0xff] %v584
    // Predicated region
    $region14: #{tpu_custom_call.1} parent=1 // pred_check
      _
    $region15: #{tpu_custom_call.1} parent=1 // pred_check_branch
      %588 = sbr.rel (0) target = $region17
    $region16: #{tpu_custom_call.1} parent=1 // pred_region
      %590 = vsyncadd [#allocation4], 0
      %s592 = sshll.u32 [#allocation5], 4
      %s593 = int_to_ptr.vmem [resolvable:$true] %s592
      %s594 = sshll.u32 %s2, 4
      %s595 = int_to_ptr.hbm [resolvable:$true] %s594
      %597 = dma.vmem_to_hbm [thread:$0]  %s593, 384, %s595, [#allocation4]
    $region17: #{tpu_custom_call.1} parent=1 // pred_fallthru
      _
    // Predicated region
    $region18: #{tpu_custom_call.1} parent=1 // pred_check
      _
    $region19: #{tpu_custom_call.1} parent=1 // pred_check_branch
      %599 = sbr.rel (0) target = $region21
    $region20: #{tpu_custom_call.1} parent=1 // pred_region
      %601 = dma.done [#allocation4], 384
    $region21: #{tpu_custom_call.1} parent=1 // pred_fallthru
      _
    %602 = vsyncpa [#allocation3], 1
    %603 = vsyncpa [#allocation4], 1

</llo_original>
